<compile_context>
chip_gen: v6e
topology: v6e:2x2x1
jax: 0.10.0
libtpu: 0.0.40
codegen_flags: <defaults>
</compile_context>

<pallas_src>
import math
import functools

import jax
import jax.numpy as jnp
from jax.experimental import pallas as pl
from jax.experimental.pallas import tpu as pltpu


_BF16 = jnp.bfloat16

# Conservative tile caps: double-buffered bf16 tiles stay well inside v5e's
# 16 MiB scoped VMEM default and v7x's 64 MiB physical VMEM.
_TM_CAP, _TN_CAP, _TK_CAP, _TF_CAP = 256, 512, 512, 512


def _round_up(x, m):
    return ((x + m - 1) // m) * m


def _pick_tile(dim, cap, align):
    """Largest `align`-multiple divisor of `dim` that is <= cap; else full dim."""
    if dim <= cap:
        return dim
    aligns = (align, 8) if align > 8 else (align,)
    for a in aligns:
        t = (cap // a) * a
        while t >= a:
            if dim % t == 0:
                return t
            t -= a
    return dim  # only reachable for pathological (prime) dims


def _ln(z, g, b, eps=1e-5):
    """LayerNorm over the last axis; z is f32, g/b are (1, E) f32."""
    mu = jnp.mean(z, axis=-1, keepdims=True)
    zc = z - mu
    var = jnp.mean(zc * zc, axis=-1, keepdims=True)
    return zc * jax.lax.rsqrt(var + eps) * g + b


# ----------------------------------------------------------------------------
# Generic tiled linear (bf16 operands, f32 accumulator)
# ----------------------------------------------------------------------------

def _linear_kernel(x_ref, w_ref, b_ref, o_ref, acc_ref, *, activation):
    @pl.when(pl.program_id(2) == 0)
    def _():
        acc_ref[...] = jnp.zeros_like(acc_ref)

    acc_ref[...] += jnp.dot(x_ref[...], w_ref[...],
                            preferred_element_type=jnp.float32)

    @pl.when(pl.program_id(2) == pl.num_programs(2) - 1)
    def _():
        y = acc_ref[...] + b_ref[...]
        if activation == "relu":
            y = jnp.maximum(y, 0.0)
        o_ref[...] = y.astype(o_ref.dtype)


def linear(x, w, b, activation=None, out_dtype=_BF16):
    """x: (M, K) bf16, w: (K, N) bf16, b: (N,) f32 -> (M, N) out_dtype."""
    M, K = x.shape
    N = w.shape[1]
    tm = _pick_tile(M, _TM_CAP, 16)
    tn = _pick_tile(N, _TN_CAP, 128)
    tk = _pick_tile(K, _TK_CAP, 128)
    kernel = functools.partial(_linear_kernel, activation=activation)
    return pl.pallas_call(
        kernel,
        out_shape=jax.ShapeDtypeStruct((M, N), out_dtype),
        grid=(M // tm, N // tn, K // tk),
        in_specs=[
            pl.BlockSpec((tm, tk), lambda i, j, k: (i, k)),
            pl.BlockSpec((tk, tn), lambda i, j, k: (k, j)),
            pl.BlockSpec((1, tn), lambda i, j, k: (0, j)),
        ],
        out_specs=pl.BlockSpec((tm, tn), lambda i, j, k: (i, j)),
        scratch_shapes=[pltpu.VMEM((tm, tn), jnp.float32)],
        compiler_params=pltpu.CompilerParams(
            dimension_semantics=("parallel", "parallel", "arbitrary")),
    )(x, w, b.reshape(1, N))


# ----------------------------------------------------------------------------
# Fused multi-head attention + out-proj + residual + LayerNorm
# ----------------------------------------------------------------------------

def _mha_ln_core(qh, kh, vh, bias, wo, bo, res, g, b):
    """qh: (H,Sq,dh) bf16, kh/vh: (H,Sk,dh) bf16, bias: (Sq,Sk) f32,
    wo: (H,dh,E) bf16, bo/g/b: (1,E) f32, res: (Sq,E) bf16 -> (Sq,E) f32."""
    # scores over all heads at once (leading batch dim, f32 accumulation)
    s = jax.lax.dot_general(qh, kh, (((2,), (2,)), ((0,), (0,))),
                            preferred_element_type=jnp.float32)        # (H,Sq,Sk)
    s = s + bias[None]
    s = s - jnp.max(s, axis=-1, keepdims=True)
    p = jnp.exp(s)
    p = p * pl.reciprocal(jnp.sum(p, axis=-1, keepdims=True), approx=True)
    # P @ V (batched over heads)
    o_h = jax.lax.dot_general(p.astype(vh.dtype), vh,
                              (((2,), (1,)), ((0,), (0,))),
                              preferred_element_type=jnp.float32)       # (H,Sq,dh)
    # fused out-projection: per-head (Sq,dh)@(dh,E) then sum heads (VPU adds);
    # this absorbs the head-merge so no (H,Sq,dh)->(Sq,E) relayout is needed.
    per_head = jax.lax.dot_general(o_h.astype(wo.dtype), wo,
                                   (((2,), (1,)), ((0,), (0,))),
                                   preferred_element_type=jnp.float32)  # (H,Sq,E)
    attn = jnp.sum(per_head, axis=0)                                     # (Sq,E)
    z = res.astype(jnp.float32) + attn + bo
    return _ln(z, g, b)


def _self_attn_kernel(qkv_ref, res_ref, am_ref, kp_ref, wo_ref, bo_ref,
                      g_ref, b_ref, o_ref, *, nhead):
    qkv = qkv_ref[0]                       # (3H, S, dh) bf16, head-major
    qh = qkv[:nhead]
    kh = qkv[nhead:2 * nhead]
    vh = qkv[2 * nhead:]
    bias = am_ref[...] + kp_ref[0]         # (Sq, Sk) f32
    out = _mha_ln_core(qh, kh, vh, bias, wo_ref[...], bo_ref[...],
                       res_ref[0], g_ref[...], b_ref[...])
    o_ref[0] = out.astype(o_ref.dtype)     # one full-lane-width store


def _cross_attn_kernel(q_ref, kv_ref, res_ref, am_ref, kp_ref, wo_ref, bo_ref,
                       g_ref, b_ref, o_ref, *, nhead):
    qh = q_ref[0]                          # (H, St, dh)
    kv = kv_ref[0]                         # (2H, Ss, dh)
    kh = kv[:nhead]
    vh = kv[nhead:]
    bias = am_ref[...] + kp_ref[0]
    out = _mha_ln_core(qh, kh, vh, bias, wo_ref[...], bo_ref[...],
                       res_ref[0], g_ref[...], b_ref[...])
    o_ref[0] = out.astype(o_ref.dtype)


def self_attention_block(qkv_h, x, attn_mask, kp_add, wo, bo, gamma, beta, nhead):
    """qkv_h: (N, 3H, S, dh) bf16 head-major; x: (N, S, E) bf16 residual."""
    N, S, E = x.shape
    dh = E // nhead
    wo_r = wo.reshape(nhead, dh, E)
    kernel = functools.partial(_self_attn_kernel, nhead=nhead)
    return pl.pallas_call(
        kernel,
        out_shape=jax.ShapeDtypeStruct((N, S, E), _BF16),
        grid=(N,),
        in_specs=[
            pl.BlockSpec((1, 3 * nhead, S, dh), lambda i: (i, 0, 0, 0)),
            pl.BlockSpec((1, S, E), lambda i: (i, 0, 0)),
            pl.BlockSpec((S, S), lambda i: (0, 0)),
            pl.BlockSpec((1, 1, S), lambda i: (i, 0, 0)),
            pl.BlockSpec((nhead, dh, E), lambda i: (0, 0, 0)),
            pl.BlockSpec((1, E), lambda i: (0, 0)),
            pl.BlockSpec((1, E), lambda i: (0, 0)),
            pl.BlockSpec((1, E), lambda i: (0, 0)),
        ],
        out_specs=pl.BlockSpec((1, S, E), lambda i: (i, 0, 0)),
        compiler_params=pltpu.CompilerParams(dimension_semantics=("parallel",)),
    )(qkv_h, x, attn_mask, kp_add, wo_r, bo.reshape(1, E),
      gamma.reshape(1, E), beta.reshape(1, E))


def cross_attention_block(q_h, kv_h, res, attn_mask, kp_add, wo, bo,
                          gamma, beta, nhead):
    """q_h: (N, H, St, dh); kv_h: (N, 2H, Ss, dh); res: (N, St, E) bf16."""
    N, St, E = res.shape
    Ss = kv_h.shape[2]
    dh = E // nhead
    wo_r = wo.reshape(nhead, dh, E)
    kernel = functools.partial(_cross_attn_kernel, nhead=nhead)
    return pl.pallas_call(
        kernel,
        out_shape=jax.ShapeDtypeStruct((N, St, E), _BF16),
        grid=(N,),
        in_specs=[
            pl.BlockSpec((1, nhead, St, dh), lambda i: (i, 0, 0, 0)),
            pl.BlockSpec((1, 2 * nhead, Ss, dh), lambda i: (i, 0, 0, 0)),
            pl.BlockSpec((1, St, E), lambda i: (i, 0, 0)),
            pl.BlockSpec((St, Ss), lambda i: (0, 0)),
            pl.BlockSpec((1, 1, Ss), lambda i: (i, 0, 0)),
            pl.BlockSpec((nhead, dh, E), lambda i: (0, 0, 0)),
            pl.BlockSpec((1, E), lambda i: (0, 0)),
            pl.BlockSpec((1, E), lambda i: (0, 0)),
            pl.BlockSpec((1, E), lambda i: (0, 0)),
        ],
        out_specs=pl.BlockSpec((1, St, E), lambda i: (i, 0, 0)),
        compiler_params=pltpu.CompilerParams(dimension_semantics=("parallel",)),
    )(q_h, kv_h, res, attn_mask, kp_add, wo_r, bo.reshape(1, E),
      gamma.reshape(1, E), beta.reshape(1, E))


# ----------------------------------------------------------------------------
# Fused FFN (tiled over hidden dim F) + residual + LayerNorm
# ----------------------------------------------------------------------------

def _ffn_add_ln_kernel(x_ref, w1_ref, b1_ref, w2_ref, b2_ref, g_ref, bt_ref,
                       o_ref, acc_ref):
    f = pl.program_id(1)

    @pl.when(f == 0)
    def _():
        acc_ref[...] = jnp.zeros_like(acc_ref)

    h = jnp.dot(x_ref[...], w1_ref[...], preferred_element_type=jnp.float32)
    h = jnp.maximum(h + b1_ref[...], 0.0).astype(_BF16)
    acc_ref[...] += jnp.dot(h, w2_ref[...], preferred_element_type=jnp.float32)

    @pl.when(f == pl.num_programs(1) - 1)
    def _():
        z = x_ref[...].astype(jnp.float32) + acc_ref[...] + b2_ref[...]
        o_ref[...] = _ln(z, g_ref[...], bt_ref[...]).astype(o_ref.dtype)


def ffn_residual_layernorm(x, w1, b1, w2, b2, gamma, beta):
    """x: (M, E) bf16 -> LayerNorm(x + relu(x@W1+b1)@W2 + b2), tiled over (M, F)."""
    M, E = x.shape
    F = w1.shape[1]
    tm = _pick_tile(M, _TM_CAP, 16)
    tf = _pick_tile(F, _TF_CAP, 128)
    return pl.pallas_call(
        _ffn_add_ln_kernel,
        out_shape=jax.ShapeDtypeStruct((M, E), _BF16),
        grid=(M // tm, F // tf),
        in_specs=[
            pl.BlockSpec((tm, E), lambda i, f: (i, 0)),
            pl.BlockSpec((E, tf), lambda i, f: (0, f)),
            pl.BlockSpec((1, tf), lambda i, f: (0, f)),
            pl.BlockSpec((tf, E), lambda i, f: (f, 0)),
            pl.BlockSpec((1, E), lambda i, f: (0, 0)),
            pl.BlockSpec((1, E), lambda i, f: (0, 0)),
            pl.BlockSpec((1, E), lambda i, f: (0, 0)),
        ],
        out_specs=pl.BlockSpec((tm, E), lambda i, f: (i, 0)),
        scratch_shapes=[pltpu.VMEM((tm, E), jnp.float32)],
        compiler_params=pltpu.CompilerParams(
            dimension_semantics=("parallel", "arbitrary")),
    )(x, w1, b1.reshape(1, F), w2, b2.reshape(1, E),
      gamma.reshape(1, E), beta.reshape(1, E))


# ----------------------------------------------------------------------------
# Standalone LayerNorm and embedding + positional encoding
# ----------------------------------------------------------------------------

def _ln_kernel(x_ref, g_ref, b_ref, o_ref):
    z = x_ref[...].astype(jnp.float32)
    o_ref[...] = _ln(z, g_ref[...], b_ref[...]).astype(o_ref.dtype)


def layernorm(x, gamma, beta):
    M, E = x.shape
    tm = _pick_tile(M, _TM_CAP, 16)
    return pl.pallas_call(
        _ln_kernel,
        out_shape=jax.ShapeDtypeStruct((M, E), _BF16),
        grid=(M // tm,),
        in_specs=[
            pl.BlockSpec((tm, E), lambda i: (i, 0)),
            pl.BlockSpec((1, E), lambda i: (0, 0)),
            pl.BlockSpec((1, E), lambda i: (0, 0)),
        ],
        out_specs=pl.BlockSpec((tm, E), lambda i: (i, 0)),
        compiler_params=pltpu.CompilerParams(dimension_semantics=("parallel",)),
    )(x, gamma.reshape(1, E), beta.reshape(1, E))


def _embed_pos_kernel(x_ref, p_ref, o_ref, *, scale):
    o_ref[0] = (x_ref[0] * scale + p_ref[...]).astype(o_ref.dtype)


def embed_plus_pos(tok_emb, pe, scale):
    """tok_emb: (N, S, E) f32; pe: (S, E) f32 -> (N, S, E) bf16."""
    N, S, E = tok_emb.shape
    kernel = functools.partial(_embed_pos_kernel, scale=scale)
    return pl.pallas_call(
        kernel,
        out_shape=jax.ShapeDtypeStruct((N, S, E), _BF16),
        grid=(N,),
        in_specs=[
            pl.BlockSpec((1, S, E), lambda i: (i, 0, 0)),
            pl.BlockSpec((S, E), lambda i: (0, 0)),
        ],
        out_specs=pl.BlockSpec((1, S, E), lambda i: (i, 0, 0)),
        compiler_params=pltpu.CompilerParams(dimension_semantics=("parallel",)),
    )(tok_emb, pe)


# ----------------------------------------------------------------------------
# Transformer layers (glue around the Pallas kernels)
# ----------------------------------------------------------------------------

def encoder_layer(x, p, attn_mask, kp_add, nhead):
    """x: (N, S, E) bf16 batch-major."""
    N, S, E = x.shape
    dh = E // nhead
    sa = p["sa"]
    qkv = linear(x.reshape(N * S, E), sa["w_qkv"], sa["b_qkv"]).reshape(N, S, 3 * E)
    # one small XLA transpose per layer -> head-major layout for the kernel
    qkv_h = qkv.reshape(N, S, 3 * nhead, dh).transpose(0, 2, 1, 3)
    x = self_attention_block(qkv_h, x, attn_mask, kp_add, sa["w_o"], sa["b_o"],
                             p["norm1_g"], p["norm1_b"], nhead)
    y = ffn_residual_layernorm(x.reshape(N * S, E), p["w1"], p["b1"],
                               p["w2"], p["b2"], p["norm2_g"], p["norm2_b"])
    return y.reshape(N, S, E)


def decoder_layer(y, mem, p, tgt_am, tgt_kp, cross_am, mem_kp, nhead):
    """y: (N, St, E), mem: (N, Ss, E) bf16 batch-major."""
    N, St, E = y.shape
    Ss = mem.shape[1]
    dh = E // nhead

    # masked self-attention
    sa = p["sa"]
    qkv = linear(y.reshape(N * St, E), sa["w_qkv"], sa["b_qkv"]).reshape(N, St, 3 * E)
    qkv_h = qkv.reshape(N, St, 3 * nhead, dh).transpose(0, 2, 1, 3)
    y = self_attention_block(qkv_h, y, tgt_am, tgt_kp, sa["w_o"], sa["b_o"],
                             p["norm1_g"], p["norm1_b"], nhead)

    # cross-attention (fused KV projection of memory)
    ca = p["ca"]
    q = linear(y.reshape(N * St, E), ca["w_q"], ca["b_q"]).reshape(N, St, E)
    q_h = q.reshape(N, St, nhead, dh).transpose(0, 2, 1, 3)
    kv = linear(mem.reshape(N * Ss, E), ca["w_kv"], ca["b_kv"]).reshape(N, Ss, 2 * E)
    kv_h = kv.reshape(N, Ss, 2 * nhead, dh).transpose(0, 2, 1, 3)
    y = cross_attention_block(q_h, kv_h, y, cross_am, mem_kp, ca["w_o"], ca["b_o"],
                              p["norm2_g"], p["norm2_b"], nhead)

    # feed-forward
    y2 = ffn_residual_layernorm(y.reshape(N * St, E), p["w1"], p["b1"],
                                p["w2"], p["b2"], p["norm3_g"], p["norm3_b"])
    return y2.reshape(N, St, E)


def seq2seq_forward(params, src, trg, src_mask, tgt_mask,
                    src_padding_mask, tgt_padding_mask, memory_key_padding_mask):
    cfg = params["cfg"]
    E, H, V = cfg["emb"], cfg["nhead"], cfg["tgt_vocab"]
    pe = params["pos_embedding"]
    scale = math.sqrt(E)

    S_src, N = src.shape
    S_tgt = trg.shape[0]

    # TokenEmbedding (gather is glue, batch-major) + PositionalEncoding kernel
    src_emb = embed_plus_pos(jnp.take(params["src_emb"], src.T, axis=0),
                             pe[:S_src], scale)                       # (N, Ss, E)
    tgt_emb = embed_plus_pos(jnp.take(params["tgt_emb"], trg.T, axis=0),
                             pe[:S_tgt], scale)                       # (N, St, E)

    # TODO(synk): -1e9 additive padding masks diverge from PyTorch -inf only
    # for query rows whose keys are ALL padded (PyTorch would produce NaN).
    src_kp = jnp.where(src_padding_mask, -1e9, 0.0).astype(jnp.float32)[:, None, :]
    tgt_kp = jnp.where(tgt_padding_mask, -1e9, 0.0).astype(jnp.float32)[:, None, :]
    mem_kp = jnp.where(memory_key_padding_mask, -1e9, 0.0).astype(jnp.float32)[:, None, :]
    src_am = src_mask.astype(jnp.float32)
    tgt_am = tgt_mask.astype(jnp.float32)
    cross_am = jnp.zeros((S_tgt, S_src), jnp.float32)

    # Encoder stack + final encoder norm
    x = src_emb
    for p in params["enc_layers"]:
        x = encoder_layer(x, p, src_am, src_kp, H)
    memory = layernorm(x.reshape(N * S_src, E),
                       params["enc_norm_g"], params["enc_norm_b"]).reshape(N, S_src, E)

    # Decoder stack + final decoder norm
    y = tgt_emb
    for p in params["dec_layers"]:
        y = decoder_layer(y, memory, p, tgt_am, tgt_kp, cross_am, mem_kp, H)

    # Transpose the SMALL (N, St, E) activation to seq-major so the generator
    # produces logits directly as (S, N, V) -- no transpose of the big logits.
    y_sm = jnp.transpose(y, (1, 0, 2)).reshape(S_tgt * N, E)
    y_sm = layernorm(y_sm, params["dec_norm_g"], params["dec_norm_b"])

    # Generator (vocab padded to a multiple of 128 at init; slice back)
    logits = linear(y_sm, params["gen_w"], params["gen_b"], out_dtype=jnp.float32)
    return logits.reshape(S_tgt, N, -1)[..., :V]


# ----------------------------------------------------------------------------
# Deterministic parameter init (synthetic; shapes follow the PyTorch module)
# ----------------------------------------------------------------------------

def build_positional_encoding(maxlen, emb):
    den = jnp.exp(-jnp.arange(0, emb, 2, dtype=jnp.float32) * math.log(10000.0) / emb)
    pos = jnp.arange(0, maxlen, dtype=jnp.float32).reshape(maxlen, 1)
    pe = jnp.zeros((maxlen, emb), dtype=jnp.float32)
    pe = pe.at[:, 0::2].set(jnp.sin(pos * den))
    pe = pe.at[:, 1::2].set(jnp.cos(pos * den))
    return pe


def init_params(key, num_enc, num_dec, emb, nhead, src_vocab, tgt_vocab, ff,
                maxlen=64):
    keys = iter(jax.random.split(key, 4096))
    dh = emb // nhead
    inv = 1.0 / math.sqrt(dh)          # folded into Wq/bq at parameter-prep time

    def wf32(shape, scale=0.02):
        return (scale * jax.random.normal(next(keys), shape)).astype(jnp.float32)

    def w(shape, scale=0.02):
        return wf32(shape, scale).astype(_BF16)

    def self_attn():
        wq, wk, wv = wf32((emb, emb)), wf32((emb, emb)), wf32((emb, emb))
        bq, bk, bv = wf32((emb,)), wf32((emb,)), wf32((emb,))
        return dict(w_qkv=jnp.concatenate([wq * inv, wk, wv], axis=1).astype(_BF16),
                    b_qkv=jnp.concatenate([bq * inv, bk, bv]),
                    w_o=w((emb, emb)), b_o=wf32((emb,)))

    def cross_attn():
        wq, wk, wv = wf32((emb, emb)), wf32((emb, emb)), wf32((emb, emb))
        bq, bk, bv = wf32((emb,)), wf32((emb,)), wf32((emb,))
        return dict(w_q=(wq * inv).astype(_BF16), b_q=bq * inv,
                    w_kv=jnp.concatenate([wk, wv], axis=1).astype(_BF16),
                    b_kv=jnp.concatenate([bk, bv]),
                    w_o=w((emb, emb)), b_o=wf32((emb,)))

    ones = lambda: jnp.ones((emb,), jnp.float32)
    zeros = lambda: jnp.zeros((emb,), jnp.float32)

    def enc_layer():
        return dict(sa=self_attn(),
                    w1=w((emb, ff)), b1=wf32((ff,)),
                    w2=w((ff, emb)), b2=wf32((emb,)),
                    norm1_g=ones(), norm1_b=zeros(),
                    norm2_g=ones(), norm2_b=zeros())

    def dec_layer():
        d = enc_layer()
        d["ca"] = cross_attn()
        d["norm3_g"] = ones()
        d["norm3_b"] = zeros()
        return d

    # Pad the generator to a multiple of 128 so vocab tiling stays MXU-shaped
    # and never falls back to one giant ragged block on v5e/v7x.
    vpad = _round_up(tgt_vocab, 128)
    gen_w = jnp.zeros((emb, vpad), jnp.float32).at[:, :tgt_vocab].set(
        wf32((emb, tgt_vocab)))
    gen_b = jnp.zeros((vpad,), jnp.float32).at[:tgt_vocab].set(wf32((tgt_vocab,)))

    return dict(
        cfg=dict(emb=emb, nhead=nhead, tgt_vocab=tgt_vocab),
        pos_embedding=build_positional_encoding(maxlen, emb),
        src_emb=wf32((src_vocab, emb), scale=1.0),
        tgt_emb=wf32((tgt_vocab, emb), scale=1.0),
        enc_layers=[enc_layer() for _ in range(num_enc)],
        dec_layers=[dec_layer() for _ in range(num_dec)],
        enc_norm_g=ones(), enc_norm_b=zeros(),
        dec_norm_g=ones(), dec_norm_b=zeros(),
        gen_w=gen_w.astype(_BF16), gen_b=gen_b,
    )


# ----------------------------------------------------------------------------

if __name__ == "__main__":
    NUM_ENC, NUM_DEC = 2, 2
    EMB, NHEAD, FF = 128, 4, 256
    SRC_VOCAB, TGT_VOCAB = 50, 60
    S_SRC, S_TGT, BATCH = 8, 8, 2

    root = jax.random.PRNGKey(0)
    kp, ks, kt = jax.random.split(root, 3)

    params = init_params(kp, NUM_ENC, NUM_DEC, EMB, NHEAD,
                         SRC_VOCAB, TGT_VOCAB, FF)

    src = jax.random.randint(ks, (S_SRC, BATCH), 0, SRC_VOCAB, dtype=jnp.int32)
    trg = jax.random.randint(kt, (S_TGT, BATCH), 0, TGT_VOCAB, dtype=jnp.int32)

    # masks follow the standard PyTorch Seq2SeqTransformer training setup
    src_mask = jnp.zeros((S_SRC, S_SRC), jnp.float32)
    tgt_mask = jnp.where(jnp.triu(jnp.ones((S_TGT, S_TGT)), k=1) == 1,
                         -1e9, 0.0).astype(jnp.float32)        # causal
    src_padding_mask = jnp.zeros((BATCH, S_SRC), bool).at[:, -2:].set(True)
    tgt_padding_mask = jnp.zeros((BATCH, S_TGT), bool).at[:, -1:].set(True)
    memory_key_padding_mask = src_padding_mask

    # TODO(synk): for long sequences, tile attention over Sk with an online-
    # softmax (flash-style) accumulator; a no-op at these demo sizes.
    logits = seq2seq_forward(params, src, trg, src_mask, tgt_mask,
                             src_padding_mask, tgt_padding_mask,
                             memory_key_padding_mask)
    jax.block_until_ready(logits)
    assert logits.shape == (S_TGT, BATCH, TGT_VOCAB)
    assert bool(jnp.all(jnp.isfinite(logits)))
    print("KERNEL_OK")
</pallas_src>

<mosaic_0001>
module attributes {stable_mosaic.version = 11 : i64} {
  func.func @_embed_pos_kernel(%arg0: i32, %arg1: memref<1x8x128xf32, #tpu.memory_space<vmem>>, %arg2: memref<8x128xf32, #tpu.memory_space<vmem>>, %arg3: memref<1x8x128xbf16, #tpu.memory_space<vmem>>) attributes {dimension_semantics = [#tpu.dimension_semantics<parallel>], iteration_bounds = array<i64: 2>, scalar_prefetch = 0 : i64, scratch_operands = 0 : i64, tpu.core_type = #tpu.core_type<tc>, window_params = [{transform_indices = @transform_0, window_bounds = array<i64: 1, 8, 128>}, {pipeline_mode = #tpu.pipeline_mode<synchronous>, transform_indices = @transform_1, window_bounds = array<i64: 8, 128>}, {transform_indices = @transform_2, window_bounds = array<i64: 1, 8, 128>}]} {
    %c0 = arith.constant 0 : index
    %c0_0 = arith.constant 0 : index
    %c0_1 = arith.constant 0 : index
    %0 = vector.load %arg1[%c0, %c0_0, %c0_1] : memref<1x8x128xf32, #tpu.memory_space<vmem>>, vector<1x8x128xf32>
    %1 = vector.shape_cast %0 : vector<1x8x128xf32> to vector<8x128xf32>
    %cst = arith.constant 11.3137083 : f32
    %2 = vector.broadcast %cst : f32 to vector<8x128xf32>
    %3 = arith.mulf %1, %2 : vector<8x128xf32>
    %c0_2 = arith.constant 0 : index
    %c0_3 = arith.constant 0 : index
    %4 = vector.load %arg2[%c0_2, %c0_3] : memref<8x128xf32, #tpu.memory_space<vmem>>, vector<8x128xf32>
    %5 = arith.addf %3, %4 : vector<8x128xf32>
    %6 = arith.truncf %5 : vector<8x128xf32> to vector<8x128xbf16>
    %c0_4 = arith.constant 0 : index
    %c0_5 = arith.constant 0 : index
    %c0_6 = arith.constant 0 : index
    %7 = vector.load %arg3[%c0_4, %c0_5, %c0_6] : memref<1x8x128xbf16, #tpu.memory_space<vmem>>, vector<1x8x128xbf16>
    %8 = vector.shape_cast %7 : vector<1x8x128xbf16> to vector<8x128xbf16>
    %9 = vector.shape_cast %6 : vector<8x128xbf16> to vector<1x8x128xbf16>
    tpu.vector_store %arg3[%c0_4, %c0_5, %c0_6], %9 {strides = array<i32>} : memref<1x8x128xbf16, #tpu.memory_space<vmem>>, vector<1x8x128xbf16>,
    return
  }
  func.func @transform_0(%arg0: i32) -> (i32, i32, i32) {
    %c0_i32 = arith.constant 0 : i32
    %c0_i32_0 = arith.constant 0 : i32
    %c0_i32_1 = arith.constant 0 : i32
    return %arg0, %c0_i32, %c0_i32_0 : i32, i32, i32
  }
  func.func @transform_1(%arg0: i32) -> (i32, i32) {
    %c0_i32 = arith.constant 0 : i32
    %c0_i32_0 = arith.constant 0 : i32
    %c0_i32_1 = arith.constant 0 : i32
    return %c0_i32, %c0_i32_0 : i32, i32
  }
  func.func @transform_2(%arg0: i32) -> (i32, i32, i32) {
    %c0_i32 = arith.constant 0 : i32
    %c0_i32_0 = arith.constant 0 : i32
    %c0_i32_1 = arith.constant 0 : i32
    return %arg0, %c0_i32, %c0_i32_0 : i32, i32, i32
  }
}

</mosaic_0001>

<llo_original>
// kernel: tpu_custom_call.1
$region0: #{tpu_custom_call.1}
  #allocation0 [shape = 'u32[]', space=smem, size = 0x4, offset = 0x4, fixed_abs, tag = 'smem constant byte address 0x4 - core index']
  #allocation1 [shape = 'u32[144,128]{1,0:T(1,128)}', space=vmem, size = 0x12000, scoped, tag = 'internal scratch']
  %s0 = inlined_call_operand.hbm [shape: f32[2,8,128], index: 0, kind: input, shape index: {}]
  %s1 = inlined_call_operand.hbm [shape: f32[8,128], index: 1, kind: input, shape index: {}]
  %s2 = inlined_call_operand.hbm [shape: bf16[2,8,128], index: 2, kind: output, shape index: {}]
  %s3 = sld [smem:[#allocation0]]
  $region49: #{tpu_custom_call.1} parent=0
    _
  %s5 = ssub.s32 1, %s3
  %s6 = scalar_select 0, %s5, %s3
  $region1: #{tpu_custom_call.1} parent=0
    #allocation2 [shape = 'u8[8192]{0}', space=vmem, size = 0x2000, scoped, tag = 'input window, operand 0']
    #allocation3 [shape = 's32[2]{0}', space=sflag, size = 0x8, scoped, tag = 'scoped memory for tpu_custom_call.1']
    #allocation4 [shape = 's32[2]{0}', space=sflag, size = 0x8, scoped, tag = 'scoped memory for tpu_custom_call.1']
    #allocation5 [shape = 'u8[4096]{0}', space=vmem, size = 0x1000, scoped, tag = 'input window, operand 1, single buffered']
    #allocation6 [shape = 's32[1]{0}', space=sflag, size = 0x4, scoped, tag = 'scoped memory for tpu_custom_call.1']
    #allocation7 [shape = 'u8[4096]{0}', space=vmem, size = 0x1000, scoped, tag = 'output window, operand 0']
    %7 = vsyncpa [#allocation3], 0
    %s8 = scalar_lea.sflag [#allocation3], 1
    %9 = vsyncpa %s8, 0
    %10 = vsyncpa [#allocation6], 0
    %11 = vsyncpa [#allocation4], 0
    %s12 = scalar_lea.sflag [#allocation4], 1
    %13 = vsyncpa %s12, 0
    loop: start=0, step=1, limit=4
    $region2: #{tpu_custom_call.1} parent=1 // loop_pre_header
      _
    $region3: #{tpu_custom_call.1} parent=1 // loop_header
      %s15 = sphi 0, %s19
      %p16 = scmp.ge.s32.totalorder %s15, 4
      %s25 = sphi 0, %s27
      %s28 = sphi 0, %s25
      %s29 = sphi 0, %s28
      %s45 = sphi 0, %s29
      %s49 = sphi 0, %s49
      %s51 = sphi 0, %s49
      %s52 = sphi 0, %s51
      %s66 = sphi 0, %s52
      %s72 = sphi 0, %s74
      %s75 = sphi 0, %s72
      %s76 = sphi 0, %s75
      %s92 = sphi 0, %s76
    $region4: #{tpu_custom_call.1} parent=1 // loop_header_branch
      %18 = sbr.rel (%p16) target = $region8
    $region5: #{tpu_custom_call.1} parent=1 // loop_body
      %s20 = ssub.s32 %s15, 1
      %s21 = ssub.s32 %s15, 2
      %s22 = sadd.s32 %s15, 1
      %s23 = ssub.s32 %s15, %s22
      %p24 = scmp.eq.s32.totalorder %s23, 0
      %s26 = sadd.s32 %s25, 1
      %s27 = scalar_select %p24, %s25, %s26
      %p30 = pneg %p24
      %p31 = scmp.eq.s32.totalorder %s15, 1
      %p32 = por %p30, %p31
      %p33 = scmp.ne.s32.totalorder %s25, %s28
      %p34 = scmp.eq.s32.totalorder %s15, 0
      %p35 = por %p33, %p34
      %p36 = scmp.ne.s32.totalorder %s25, %s28
      %p37 = scmp.eq.s32.totalorder %s20, 1
      %p38 = por %p36, %p37
      %p39 = scmp.ne.s32.totalorder %s28, %s29
      %p40 = scmp.eq.s32.totalorder %s20, 0
      %p41 = por %p39, %p40
      %p42 = scmp.ne.s32.totalorder %s28, %s29
      %p43 = scmp.eq.s32.totalorder %s21, 1
      %p44 = por %p42, %p43
      %p46 = scmp.ne.s32.totalorder %s29, %s45
      %p47 = scmp.eq.s32.totalorder %s21, 0
      %p48 = por %p46, %p47
      %s50 = sadd.s32 %s49, 1
      %p53 = scmp.eq.s32.totalorder %s15, 1
      %p54 = scmp.ne.s32.totalorder %s49, %s51
      %p55 = scmp.eq.s32.totalorder %s15, 0
      %p56 = por %p54, %p55
      %p57 = scmp.ne.s32.totalorder %s49, %s51
      %p58 = scmp.eq.s32.totalorder %s20, 1
      %p59 = por %p57, %p58
      %p60 = scmp.ne.s32.totalorder %s51, %s52
      %p61 = scmp.eq.s32.totalorder %s20, 0
      %p62 = por %p60, %p61
      %p63 = scmp.ne.s32.totalorder %s51, %s52
      %p64 = scmp.eq.s32.totalorder %s21, 1
      %p65 = por %p63, %p64
      %p67 = scmp.ne.s32.totalorder %s52, %s66
      %p68 = scmp.eq.s32.totalorder %s21, 0
      %p69 = por %p67, %p68
      %s70 = ssub.s32 %s15, %s22
      %p71 = scmp.eq.s32.totalorder %s70, 0
      %s73 = sadd.s32 %s72, 1
      %s74 = scalar_select %p71, %s72, %s73
      %p77 = pneg %p71
      %p78 = scmp.eq.s32.totalorder %s15, 1
      %p79 = por %p77, %p78
      %p80 = scmp.ne.s32.totalorder %s72, %s75
      %p81 = scmp.eq.s32.totalorder %s15, 0
      %p82 = por %p80, %p81
      %p83 = scmp.ne.s32.totalorder %s72, %s75
      %p84 = scmp.eq.s32.totalorder %s20, 1
      %p85 = por %p83, %p84
      %p86 = scmp.ne.s32.totalorder %s75, %s76
      %p87 = scmp.eq.s32.totalorder %s20, 0
      %p88 = por %p86, %p87
      %p89 = scmp.ne.s32.totalorder %s75, %s76
      %p90 = scmp.eq.s32.totalorder %s21, 1
      %p91 = por %p89, %p90
      %p93 = scmp.ne.s32.totalorder %s76, %s92
      %p94 = scmp.eq.s32.totalorder %s21, 0
      %p95 = por %p93, %p94
      %p96 = scmp.le.s32.totalorder 1, %s15
      %p97 = scmp.lt.s32.totalorder %s15, 3
      %p98 = pnand %p96, %p97
      %p99 = pneg %p98
      // Predicated region
      $region9: #{tpu_custom_call.1} parent=5 // pred_check
        _
      $region10: #{tpu_custom_call.1} parent=5 // pred_check_branch
        %101 = sbr.rel (%p98) target = $region12
      $region11: #{tpu_custom_call.1} parent=5 // pred_region
        %s102 = ssub.s32 %s15, 1
        // Predicated region
        $region13: #{tpu_custom_call.1} parent=11 // pred_check
          %p103 = pneg %p62
        $region14: #{tpu_custom_call.1} parent=11 // pred_check_branch
          %105 = sbr.rel (%p103) target = $region16
        $region15: #{tpu_custom_call.1} parent=11 // pred_region
          %s107 = ssub.s32 128, 128
          %108 = vsyncadd [#allocation6], %s107
          %s110 = sshll.u32 [#allocation5], 4
          %s111 = int_to_ptr.vmem [resolvable:$true] %s110
          %113 = dma.hbm_to_vmem [thread:$0]  %s1, 128, %s111, [#allocation6]
        $region16: #{tpu_custom_call.1} parent=11 // pred_fallthru
          _
      $region12: #{tpu_custom_call.1} parent=5 // pred_fallthru
        _
      %p114 = scmp.lt.s32.totalorder %s15, 2
      // Predicated region
      $region17: #{tpu_custom_call.1} parent=5 // pred_check
        %p115 = pneg %p114
      $region18: #{tpu_custom_call.1} parent=5 // pred_check_branch
        %117 = sbr.rel (%p115) target = $region20
      $region19: #{tpu_custom_call.1} parent=5 // pred_region
        // Predicated region
        $region21: #{tpu_custom_call.1} parent=19 // pred_check
          %p118 = pneg %p35
        $region22: #{tpu_custom_call.1} parent=19 // pred_check_branch
          %120 = sbr.rel (%p118) target = $region24
        $region23: #{tpu_custom_call.1} parent=19 // pred_region
          %s121 = sand.u32 %s25, 1
          %s122 = scalar_lea.sflag [#allocation3], %s121
          %s123 = sand.u32 %s25, 1
          %s124 = smul.addr %s123, 8
          %s125 = scalar_lea.vmem [#allocation2], %s124
          %s127 = ssub.s32 128, 128
          %128 = vsyncadd %s122, %s127
          %s129 = smul.addr %s15, 128
          %s130 = scalar_lea.hbm %s0, %s129
          %s132 = sshll.u32 %s125, 4
          %s133 = int_to_ptr.vmem [resolvable:$true] %s132
          %135 = dma.hbm_to_vmem [thread:$0]  %s130, 128, %s133, %s122
        $region24: #{tpu_custom_call.1} parent=19 // pred_fallthru
          _
      $region20: #{tpu_custom_call.1} parent=5 // pred_fallthru
        _
      %p136 = scmp.le.s32.totalorder 1, %s15
      %p137 = scmp.lt.s32.totalorder %s15, 3
      %p138 = pnand %p136, %p137
      %p139 = pneg %p138
      // Predicated region
      $region25: #{tpu_custom_call.1} parent=5 // pred_check
        _
      $region26: #{tpu_custom_call.1} parent=5 // pred_check_branch
        %141 = sbr.rel (%p138) target = $region28
      $region27: #{tpu_custom_call.1} parent=5 // pred_region
        %s142 = ssub.s32 %s15, 1
        %s143 = sand.u32 %s28, 1
        %s144 = scalar_lea.sflag [#allocation3], %s143
        %s145 = sand.u32 %s28, 1
        %s146 = smul.addr %s145, 8
        %s147 = scalar_lea.vmem [#allocation2], %s146
        // Predicated region
        $region29: #{tpu_custom_call.1} parent=27 // pred_check
          %p148 = pneg %p41
        $region30: #{tpu_custom_call.1} parent=27 // pred_check_branch
          %150 = sbr.rel (%p148) target = $region32
        $region31: #{tpu_custom_call.1} parent=27 // pred_region
          %151 = dma.done %s144, 128
        $region32: #{tpu_custom_call.1} parent=27 // pred_fallthru
          _
        // Predicated region
        $region33: #{tpu_custom_call.1} parent=27 // pred_check
          %p152 = pneg %p62
        $region34: #{tpu_custom_call.1} parent=27 // pred_check_branch
          %154 = sbr.rel (%p152) target = $region36
        $region35: #{tpu_custom_call.1} parent=27 // pred_region
          %155 = dma.done [#allocation6], 128
        $region36: #{tpu_custom_call.1} parent=27 // pred_fallthru
          _
        %s156 = sand.u32 %s28, 1
        %s157 = scalar_lea.sflag [#allocation3], %s156
        %s158 = sand.u32 %s28, 1
        %s159 = smul.addr %s158, 8
        %s160 = scalar_lea.vmem [#allocation2], %s159
        %p161 = pneg %p41
        %p162 = pneg %p38
        %p163 = pneg %p62
        %p164 = pneg %p59
        %p165 = pneg %p88
        %p166 = pneg %p85
        %s167 = sand.u32 %s75, 1
        %s168 = scalar_lea.sflag [#allocation4], %s167
        %s169 = sand.u32 %s75, 1
        %s170 = smul.addr %s169, 4
        %s171 = scalar_lea.vmem [#allocation7], %s170
        %v172 = vld [vmem:[%s147] sm:$0xff]
        %v173 = vmul.f32 %v172, 11.313708
        %v174 = vld [vmem:[#allocation5] sm:$0xff]
        %v175 = vadd.f32 %v173, %v174
        %v176 = vpack.c.bf16 %v175, %v175
        %177 = vst [vmem:[%s171] sm:$0xf] %v176
        %s178 = sand.u32 %s75, 1
        %s179 = scalar_lea.sflag [#allocation4], %s178
        %s180 = sand.u32 %s75, 1
        %s181 = smul.addr %s180, 4
        %s182 = scalar_lea.vmem [#allocation7], %s181
        // Predicated region
        $region37: #{tpu_custom_call.1} parent=27 // pred_check
          %p183 = pneg %p85
        $region38: #{tpu_custom_call.1} parent=27 // pred_check_branch
          %185 = sbr.rel (%p183) target = $region40
        $region39: #{tpu_custom_call.1} parent=27 // pred_region
          %s187 = ssub.s32 64, 64
          %188 = vsyncadd %s179, %s187
          %s189 = smul.addr %s20, 64
          %s190 = scalar_lea.hbm %s2, %s189
          %s192 = sshll.u32 %s182, 4
          %s193 = int_to_ptr.vmem [resolvable:$true] %s192
          %195 = dma.vmem_to_hbm [thread:$0]  %s193, 64, %s190, %s179
        $region40: #{tpu_custom_call.1} parent=27 // pred_fallthru
          _
      $region28: #{tpu_custom_call.1} parent=5 // pred_fallthru
        _
      %p196 = scmp.le.s32.totalorder 2, %s15
      // Predicated region
      $region41: #{tpu_custom_call.1} parent=5 // pred_check
        %p197 = pneg %p196
      $region42: #{tpu_custom_call.1} parent=5 // pred_check_branch
        %199 = sbr.rel (%p197) target = $region44
      $region43: #{tpu_custom_call.1} parent=5 // pred_region
        %s200 = ssub.s32 %s15, 2
        // Predicated region
        $region45: #{tpu_custom_call.1} parent=43 // pred_check
          %p201 = pneg %p91
        $region46: #{tpu_custom_call.1} parent=43 // pred_check_branch
          %203 = sbr.rel (%p201) target = $region48
        $region47: #{tpu_custom_call.1} parent=43 // pred_region
          %s204 = sand.u32 %s76, 1
          %s205 = scalar_lea.sflag [#allocation4], %s204
          %s206 = sand.u32 %s76, 1
          %s207 = smul.addr %s206, 4
          %s208 = scalar_lea.vmem [#allocation7], %s207
          %209 = dma.done %s205, 64
        $region48: #{tpu_custom_call.1} parent=43 // pred_fallthru
          _
      $region44: #{tpu_custom_call.1} parent=5 // pred_fallthru
        _
    $region6: #{tpu_custom_call.1} parent=1 // loop_footer
      %s19 = sadd.s32 1, %s15
    $region7: #{tpu_custom_call.1} parent=1 // loop_footer_branch
      %14 = sbr.rel target = $region3
    $region8: #{tpu_custom_call.1} parent=1 // loop_exit
      _
    %210 = vsyncpa [#allocation3], 1
    %s211 = scalar_lea.sflag [#allocation3], 1
    %212 = vsyncpa %s211, 1
    %213 = vsyncpa [#allocation6], 1
    %214 = vsyncpa [#allocation4], 1
    %s215 = scalar_lea.sflag [#allocation4], 1
    %216 = vsyncpa %s215, 1

</llo_original>
